<compile_context>
chip_gen: v6e
topology: v6e:2x2x1
jax: 0.10.0
libtpu: 0.0.40
codegen_flags: <defaults>
</compile_context>

<pallas_src>
import functools

import jax
import jax.numpy as jnp
import numpy as np
from jax.experimental import pallas as pl
from jax.experimental.pallas import tpu as pltpu


def _dense_block_kernel(x_ref, w_ref, b_ref, out_ref, *, C, F, Tp, dilation):
    """One grid step: Nb batch segments folded along the lane axis.

    x_ref  : (C, Nb*Tp)    Nb time-padded segments, back to back on lanes
    w_ref  : (4F, C)       stacked conv weights [Wf0; Wg0; Wf1; Wg1]
    b_ref  : (2F, 1)       stacked bias [bf; bg]
    out_ref: (C+F, Nb*Tp)  [x ; tanh(xf) * sigmoid(xg)]
    """
    x = x_ref[...]                                                   # (C, L)

    # Single fused MXU matmul covering both filters (f, g) and both taps.
    z = jnp.dot(w_ref[...], x, preferred_element_type=jnp.float32)  # (4F, L)
    z_prev = z[: 2 * F]      # tap W0 -> needs the causal shift by d
    z_curr = z[2 * F:]       # tap W1 -> already aligned with output position

    # Causal t-d tap: shift right by d along lanes (XLU roll), then zero the
    # first d positions of every Tp-long segment.  Roll wrap-around and
    # cross-segment leakage land exactly on the masked positions, so no halo
    # or padded copy of x is needed.
    shifted = pltpu.roll(z_prev, shift=dilation, axis=1)
    lane = jax.lax.broadcasted_iota(jnp.int32, shifted.shape, 1)
    t_in_seg = jnp.bitwise_and(lane, Tp - 1)        # Tp is a power of two
    prev = jnp.where(t_in_seg >= dilation, shifted, 0.0)

    y = prev + z_curr + b_ref[...]                                   # (2F, L)
    act = jnp.tanh(y[:F]) * jax.nn.sigmoid(y[F:])                    # (F, L)

    # Fused channel concat: passthrough + gated activations, one output block.
    # TODO(synk): in stacked TCBlocks the x passthrough re-streams x through
    # HBM every layer; a consumer-side concat/alias would drop that traffic.
    out_ref[:C, :] = x.astype(out_ref.dtype)
    out_ref[C:, :] = act.astype(out_ref.dtype)


def dense_block_forward(x_nct, wf, bf, wg, bg, dilation, *, target_lanes=512):
    """DenseBlock forward.  x_nct: (N, C, T) f32.  wf/wg: (F, C, 2).  bf/bg: (F,)."""
    N, C, T = x_nct.shape
    F = wf.shape[0]
    d = int(dilation)

    # Lane-friendly sizing: pad T up to a power of two, fold Nb batches per step.
    Tp = max(int(pl.next_power_of_2(T)), 8)
    Nb = min(int(pl.next_power_of_2(N)), max(1, target_lanes // Tp))
    Npad = int(pl.cdiv(N, Nb)) * Nb
    lane_block = Nb * Tp                 # multiple of 128 whenever grid > 1
    grid = (Npad // Nb,)

    # Layout plumbing (not compute): (N, C, T) -> (C, Npad*Tp) slab with
    # batch*time on the lane axis.  Replaces v2's per-batch causal left-pad.
    xp = jnp.pad(x_nct, ((0, Npad - N), (0, 0), (0, Tp - T)))
    x_slab = jnp.transpose(xp, (1, 0, 2)).reshape(C, Npad * Tp)

    # Stacked weights / bias: both taps and both gates fused into one matmul.
    w_stack = jnp.concatenate(
        [wf[:, :, 0], wg[:, :, 0], wf[:, :, 1], wg[:, :, 1]], axis=0)  # (4F, C)
    b_stack = jnp.concatenate([bf, bg], axis=0).reshape(2 * F, 1)      # (2F, 1)

    kernel = functools.partial(_dense_block_kernel, C=C, F=F, Tp=Tp, dilation=d)

    # Explicit VMEM budget: double-buffered (in block + out block) + weights.
    item = x_nct.dtype.itemsize
    need = (2 * (C * lane_block + (C + F) * lane_block)
            + 2 * (4 * F * C + 2 * F)) * item
    vmem_limit = int(min(max(2 * need, 32 << 20), 64 << 20))

    out_slab = pl.pallas_call(
        kernel,
        out_shape=jax.ShapeDtypeStruct((C + F, Npad * Tp), x_nct.dtype),
        grid=grid,
        in_specs=[
            pl.BlockSpec((C, lane_block), lambda g: (0, g)),      # folded batches
            pl.BlockSpec((4 * F, C), lambda g: (0, 0)),           # weights, resident
            pl.BlockSpec((2 * F, 1), lambda g: (0, 0)),           # bias, resident
        ],
        out_specs=pl.BlockSpec((C + F, lane_block), lambda g: (0, g)),
        compiler_params=pltpu.CompilerParams(
            dimension_semantics=("parallel",),
            vmem_limit_bytes=vmem_limit),
    )(x_slab, w_stack, b_stack)

    # Undo the layout plumbing: (C+F, Npad*Tp) -> (N, C+F, T).
    out = jnp.transpose(out_slab.reshape(C + F, Npad, Tp), (1, 0, 2))
    return out[:N, :, :T]


def _reference(x_nct, wf, bf, wg, bg, dilation):
    """Pure-JAX reference matching nn.Conv1d(padding=d, dilation=d)[..., :-d]."""
    def causal_conv(w, b):
        y = jax.lax.conv_general_dilated(
            x_nct, w, window_strides=(1,), padding=[(dilation, dilation)],
            rhs_dilation=(dilation,),
            dimension_numbers=("NCH", "OIH", "NCH"))
        return y[:, :, :-dilation] + b[None, :, None]

    xf = causal_conv(wf, bf)
    xg = causal_conv(wg, bg)
    act = jnp.tanh(xf) * jax.nn.sigmoid(xg)
    return jnp.concatenate([x_nct, act], axis=1)


def _run_case(key, N, C, T, F, K, dilation, rtol=1e-3, atol=1e-3):
    kx, k1, k2, k3, k4 = jax.random.split(key, 5)
    x = jax.random.normal(kx, (N, C, T), dtype=jnp.float32)

    bound = 1.0 / np.sqrt(C * K)   # Conv1d-style init bound
    wf = jax.random.uniform(k1, (F, C, K), jnp.float32, -bound, bound)
    bf = jax.random.uniform(k2, (F,), jnp.float32, -bound, bound)
    wg = jax.random.uniform(k3, (F, C, K), jnp.float32, -bound, bound)
    bg = jax.random.uniform(k4, (F,), jnp.float32, -bound, bound)

    out = jax.block_until_ready(dense_block_forward(x, wf, bf, wg, bg, dilation))
    ref = jax.block_until_ready(_reference(x, wf, bf, wg, bg, dilation))

    assert out.shape == (N, C + F, T), out.shape
    np.testing.assert_allclose(np.asarray(out), np.asarray(ref),
                               rtol=rtol, atol=atol)


if __name__ == "__main__":
    key = jax.random.PRNGKey(0)
    k_small, k_mid, k_big = jax.random.split(key, 3)

    # Small demo shapes: batch=2, channels=4, T=16 (single grid step).
    _run_case(k_small, N=2, C=4, T=16, F=8, K=2, dilation=2)

    # SNAIL-like per-layer shape (seq = N*K+1 style).
    _run_case(k_mid, N=2, C=64, T=26, F=32, K=2, dilation=4)

    # Multi-step grid path: batch folded 16-per-step (lane width 512),
    # batch remainder padding, channel count not a multiple of 8.
    _run_case(k_big, N=20, C=36, T=26, F=24, K=2, dilation=8)

    print("KERNEL_OK")
</pallas_src>

<mosaic_0001>
module attributes {stable_mosaic.version = 11 : i64} {
  func.func @_dense_block_kernel(%arg0: i32, %arg1: memref<4x32xf32, #tpu.memory_space<vmem>>, %arg2: memref<32x4xf32, #tpu.memory_space<vmem>>, %arg3: memref<16x1xf32, #tpu.memory_space<vmem>>, %arg4: memref<12x32xf32, #tpu.memory_space<vmem>>) attributes {dimension_semantics = [#tpu.dimension_semantics<parallel>], iteration_bounds = array<i64: 1>, scalar_prefetch = 0 : i64, scratch_operands = 0 : i64, tpu.core_type = #tpu.core_type<tc>, window_params = [{transform_indices = @transform_0, window_bounds = array<i64: 4, 32>}, {pipeline_mode = #tpu.pipeline_mode<synchronous>, transform_indices = @transform_1, window_bounds = array<i64: 32, 4>}, {pipeline_mode = #tpu.pipeline_mode<synchronous>, transform_indices = @transform_2, window_bounds = array<i64: 16, 1>}, {transform_indices = @transform_3, window_bounds = array<i64: 12, 32>}]} {
    %c0 = arith.constant 0 : index
    %c0_0 = arith.constant 0 : index
    %0 = vector.load %arg1[%c0, %c0_0] : memref<4x32xf32, #tpu.memory_space<vmem>>, vector<4x32xf32>
    %c0_1 = arith.constant 0 : index
    %c0_2 = arith.constant 0 : index
    %1 = vector.load %arg2[%c0_1, %c0_2] : memref<32x4xf32, #tpu.memory_space<vmem>>, vector<32x4xf32>
    %cst = arith.constant dense<0.000000e+00> : vector<32x32xf32>
    %2 = tpu.matmul %1, %0, %cst {dimension_numbers = #tpu.dot_dimension_numbers<[1], [0], [0], [1], [0, 0, 1, 1], [], []>} : vector<32x4xf32>, vector<4x32xf32>, vector<32x32xf32> -> vector<32x32xf32>
    %3 = vector.extract_strided_slice %2 {offsets = [0, 0], sizes = [16, 32], strides = [1, 1]} : vector<32x32xf32> to vector<16x32xf32>
    %4 = vector.extract_strided_slice %2 {offsets = [16, 0], sizes = [16, 32], strides = [1, 1]} : vector<32x32xf32> to vector<16x32xf32>
    %c2_i32 = arith.constant 2 : i32
    %5 = tpu.dynamic_rotate %3 by %c2_i32 dim 1 : vector<16x32xf32>, i32 -> vector<16x32xf32>
    %6 = tpu.iota {dimensions = array<i32: 1>} : vector<16x32xi32>
    %c15_i32 = arith.constant 15 : i32
    %7 = vector.broadcast %c15_i32 : i32 to vector<16x32xi32>
    %8 = arith.andi %6, %7 : vector<16x32xi32>
    %c2_i32_3 = arith.constant 2 : i32
    %9 = vector.broadcast %c2_i32_3 : i32 to vector<16x32xi32>
    %10 = arith.cmpi sge, %8, %9 : vector<16x32xi32>
    %cst_4 = arith.constant 0.000000e+00 : f32
    %11 = vector.broadcast %cst_4 : f32 to vector<16x32xf32>
    %12 = arith.select %10, %5, %11 : vector<16x32xi1>, vector<16x32xf32>
    %13 = arith.addf %12, %4 : vector<16x32xf32>
    %c0_5 = arith.constant 0 : index
    %c0_6 = arith.constant 0 : index
    %14 = vector.load %arg3[%c0_5, %c0_6] : memref<16x1xf32, #tpu.memory_space<vmem>>, vector<16x1xf32>
    %15 = vector.broadcast %14 : vector<16x1xf32> to vector<16x32xf32>
    %16 = arith.addf %13, %15 : vector<16x32xf32>
    %17 = vector.extract_strided_slice %16 {offsets = [0, 0], sizes = [8, 32], strides = [1, 1]} : vector<16x32xf32> to vector<8x32xf32>
    %18 = math.tanh %17 : vector<8x32xf32>
    %19 = vector.extract_strided_slice %16 {offsets = [8, 0], sizes = [8, 32], strides = [1, 1]} : vector<16x32xf32> to vector<8x32xf32>
    %20 = arith.negf %19 : vector<8x32xf32>
    %21 = math.exp %20 : vector<8x32xf32>
    %cst_7 = arith.constant 1.000000e+00 : f32
    %22 = vector.broadcast %cst_7 : f32 to vector<8x32xf32>
    %23 = arith.addf %22, %21 : vector<8x32xf32>
    %24 = arith.divf %22, %23 : vector<8x32xf32>
    %25 = arith.mulf %18, %24 : vector<8x32xf32>
    %c0_8 = arith.constant 0 : index
    %c0_9 = arith.constant 0 : index
    %26 = vector.load %arg4[%c0_8, %c0_9] : memref<12x32xf32, #tpu.memory_space<vmem>>, vector<4x32xf32>
    tpu.vector_store %arg4[%c0_8, %c0_9], %0 {strides = array<i32>} : memref<12x32xf32, #tpu.memory_space<vmem>>, vector<4x32xf32>,
    %c4 = arith.constant 4 : index
    %c0_10 = arith.constant 0 : index
    %27 = vector.load %arg4[%c4, %c0_10] : memref<12x32xf32, #tpu.memory_space<vmem>>, vector<8x32xf32>
    tpu.vector_store %arg4[%c4, %c0_10], %25 {strides = array<i32>} : memref<12x32xf32, #tpu.memory_space<vmem>>, vector<8x32xf32>,
    return
  }
  func.func @transform_0(%arg0: i32) -> (i32, i32) {
    %c0_i32 = arith.constant 0 : i32
    %c0_i32_0 = arith.constant 0 : i32
    return %c0_i32, %arg0 : i32, i32
  }
  func.func @transform_1(%arg0: i32) -> (i32, i32) {
    %c0_i32 = arith.constant 0 : i32
    %c0_i32_0 = arith.constant 0 : i32
    %c0_i32_1 = arith.constant 0 : i32
    return %c0_i32, %c0_i32_0 : i32, i32
  }
  func.func @transform_2(%arg0: i32) -> (i32, i32) {
    %c0_i32 = arith.constant 0 : i32
    %c0_i32_0 = arith.constant 0 : i32
    %c0_i32_1 = arith.constant 0 : i32
    return %c0_i32, %c0_i32_0 : i32, i32
  }
  func.func @transform_3(%arg0: i32) -> (i32, i32) {
    %c0_i32 = arith.constant 0 : i32
    %c0_i32_0 = arith.constant 0 : i32
    return %c0_i32, %arg0 : i32, i32
  }
}

</mosaic_0001>

<llo_original>
// kernel: tpu_custom_call.1
$region0: #{tpu_custom_call.1}
  #allocation0 [shape = 'u32[]', space=smem, size = 0x4, offset = 0x4, fixed_abs, tag = 'smem constant byte address 0x4 - core index']
  #allocation1 [shape = 'u32[144,128]{1,0:T(1,128)}', space=vmem, size = 0x12000, scoped, tag = 'internal scratch']
  %s0 = inlined_call_operand.vmem [shape: f32[4,32], index: 0, kind: input, shape index: {}]
  %s1 = inlined_call_operand.vmem [shape: f32[32,4], index: 1, kind: input, shape index: {}]
  %s2 = inlined_call_operand.vmem [shape: f32[16,1], index: 2, kind: input, shape index: {}]
  %s3 = inlined_call_operand.hbm [shape: f32[12,32], index: 3, kind: output, shape index: {}]
  %s4 = sld [smem:[#allocation0]]
  $region22: #{tpu_custom_call.1} parent=0
    _
  %s6 = ssub.s32 1, %s4
  %s7 = scalar_select 0, %s6, %s4
  $region1: #{tpu_custom_call.1} parent=0
    #allocation2 [shape = 'u8[8192]{0}', space=vmem, size = 0x2000, scoped, tag = 'output window, operand 0, single buffered']
    #allocation3 [shape = 's32[1]{0}', space=sflag, size = 0x4, scoped, tag = 'scoped memory for tpu_custom_call.1']
    %8 = vsyncpa [#allocation3], 0
    // Predicated region
    $region2: #{tpu_custom_call.1} parent=1 // pred_check
      _
    $region3: #{tpu_custom_call.1} parent=1 // pred_check_branch
      %10 = sbr.rel (0) target = $region5
    $region4: #{tpu_custom_call.1} parent=1 // pred_region
      _
    $region5: #{tpu_custom_call.1} parent=1 // pred_fallthru
      _
    // Predicated region
    $region6: #{tpu_custom_call.1} parent=1 // pred_check
      _
    $region7: #{tpu_custom_call.1} parent=1 // pred_check_branch
      %12 = sbr.rel (0) target = $region9
    $region8: #{tpu_custom_call.1} parent=1 // pred_region
      _
    $region9: #{tpu_custom_call.1} parent=1 // pred_fallthru
      _
    // Predicated region
    $region10: #{tpu_custom_call.1} parent=1 // pred_check
      _
    $region11: #{tpu_custom_call.1} parent=1 // pred_check_branch
      %14 = sbr.rel (0) target = $region13
    $region12: #{tpu_custom_call.1} parent=1 // pred_region
      _
    $region13: #{tpu_custom_call.1} parent=1 // pred_fallthru
      _
    %v15 = vld [vmem:[%s0] sm:$0xf]
    %v16 = vld [vmem:[%s1] sm:$0xff]
    %v17 = vld [vmem:[%s1 + $0x8] sm:$0xff]
    %v18 = vld [vmem:[%s1 + $0x10] sm:$0xff]
    %v19 = vld [vmem:[%s1 + $0x18] sm:$0xff]
    %vm20 = vcmask 31744
    %v22 = vsel %vm20, %v16, 0
    %v25 = vsel %vm20, %v17, 0
    %v28 = vsel %vm20, %v18, 0
    %v31 = vsel %vm20, %v19, 0
    %vm33 = vcmask 1043456
    %v35 = vsel %vm33, %v15, 0
    %37 = vmatprep.subr.mxu0 0.0
    %38 = vmatpush1.msra.mxu0 0.0
    %39 = vmatprep.subr.mxu0 0.0
    %40 = vmatpush1.msra.mxu0 0.0
    %41 = vmatprep.subr.mxu0 0.0
    %42 = vmatpush1.msra.mxu0 0.0
    %43 = vmatprep.subr.mxu0 0.0
    %44 = vmatpush1.msra.mxu0 0.0
    %45 = vmatprep.subr.mxu0 0.0
    %46 = vmatpush1.msra.mxu0 0.0
    %47 = vmatprep.subr.mxu0 0.0
    %48 = vmatpush1.msra.mxu0 0.0
    %49 = vmatprep.subr.mxu0 0.0
    %50 = vmatpush1.msra.mxu0 0.0
    %51 = vmatprep.subr.mxu0 0.0
    %52 = vmatpush1.msra.mxu0 0.0
    %53 = vmatprep.subr.mxu0 0.0
    %54 = vmatpush1.msra.mxu0 0.0
    %55 = vmatprep.subr.mxu0 0.0
    %56 = vmatpush1.msra.mxu0 0.0
    %57 = vmatprep.subr.mxu0 0.0
    %58 = vmatpush1.msra.mxu0 0.0
    %59 = vmatprep.subr.mxu0 0.0
    %60 = vmatpush1.msra.mxu0 0.0
    %61 = vmatprep.subr.mxu0 0.0
    %62 = vmatpush1.msra.mxu0 0.0
    %63 = vmatprep.subr.mxu0 0.0
    %64 = vmatpush1.msra.mxu0 0.0
    %65 = vmatprep.subr.mxu0 0.0
    %66 = vmatpush1.msra.mxu0 0.0
    %67 = vmatprep.subr.mxu0 0.0
    %68 = vmatpush1.msra.mxu0 %v35
    %69 = vmatprep.subr.mxu0 0.0
    %70 = vmatpush2.msra.mxu0 0.0
    %71 = vmatprep.subr.mxu0 0.0
    %72 = vmatpush2.msra.mxu0 0.0
    %73 = vmatprep.subr.mxu0 0.0
    %74 = vmatpush2.msra.mxu0 0.0
    %75 = vmatprep.subr.mxu0 0.0
    %76 = vmatpush2.msra.mxu0 0.0
    %77 = vmatprep.subr.mxu0 0.0
    %78 = vmatpush2.msra.mxu0 0.0
    %79 = vmatprep.subr.mxu0 0.0
    %80 = vmatpush2.msra.mxu0 0.0
    %81 = vmatprep.subr.mxu0 0.0
    %82 = vmatpush2.msra.mxu0 0.0
    %83 = vmatprep.subr.mxu0 0.0
    %84 = vmatpush2.msra.mxu0 0.0
    %85 = vmatprep.subr.mxu0 0.0
    %86 = vmatpush2.msra.mxu0 0.0
    %87 = vmatprep.subr.mxu0 0.0
    %88 = vmatpush2.msra.mxu0 0.0
    %89 = vmatprep.subr.mxu0 0.0
    %90 = vmatpush2.msra.mxu0 0.0
    %91 = vmatprep.subr.mxu0 0.0
    %92 = vmatpush2.msra.mxu0 0.0
    %93 = vmatprep.subr.mxu0 0.0
    %94 = vmatpush2.msra.mxu0 0.0
    %95 = vmatprep.subr.mxu0 0.0
    %96 = vmatpush2.msra.mxu0 0.0
    %97 = vmatprep.subr.mxu0 0.0
    %98 = vmatpush2.msra.mxu0 0.0
    %99 = vmatprep.subr.mxu0 0.0
    %100 = vmatpush2.msra.mxu0 0.0
    %101 = vmatprep.mubr.f32.mxu0 0.0
    %102 = vmatmul.mubr.f32.gmra.mxu0 %v22
    %v103 = vpop.f32.mrf.mxu0
    %v104 = vadd.f32 0.0, %v103
    %v105 = vpop.f32.mrf.mxu0
    %106 = vmatprep.mubr.f32.mxu0 0.0
    %107 = vmatmul.mubr.f32.gmra.mxu0 %v25
    %v108 = vpop.f32.mrf.mxu0
    %v109 = vadd.f32 0.0, %v108
    %v110 = vpop.f32.mrf.mxu0
    %111 = vmatprep.mubr.f32.mxu0 0.0
    %112 = vmatmul.mubr.f32.gmra.mxu0 %v28
    %v113 = vpop.f32.mrf.mxu0
    %v114 = vadd.f32 0.0, %v113
    %v115 = vpop.f32.mrf.mxu0
    %116 = vmatprep.mubr.f32.mxu0 0.0
    %117 = vmatmul.mubr.f32.gmra.mxu0 %v31
    %v118 = vpop.f32.mrf.mxu0
    %v119 = vadd.f32 0.0, %v118
    %v120 = vpop.f32.mrf.mxu0
    %121 = vdwg.mxu0
    %vm122 = vcmask 1047808
    %123 = vrot.lane.b32.xlu0 %v104, 32
    %v124 = vpop.permute.xlu0 %123
    %v125 = vsel %vm122, %v124, %v104
    %126 = vrot.lane.b32.xlu0 %v109, 32
    %v127 = vpop.permute.xlu0 %126
    %v128 = vsel %vm122, %v127, %v109
    %129 = vrot.lane.b32.xlu0 %v125, 32
    %v130 = vpop.permute.xlu0 %129
    %131 = vrot.lane.b32.xlu0 %v128, 32
    %v132 = vpop.permute.xlu0 %131
    %v133 = vsel %vm122, %v130, %v104
    %v134 = vsel %vm122, %v132, %v109
    %v135 = vlaneseq
    %v136 = vand.u32 %v135, 127
    %v137 = vand.u32 %v136, 15
    %vm138 = vcmp.ge.s32.totalorder %v137, 2
    %141 = vrot.lane.b32.xlu0 %v133, 98
    %v142 = vpop.permute.xlu0 %141
    %143 = vrot.lane.b32.xlu0 %v134, 98
    %v144 = vpop.permute.xlu0 %143
    %v147 = vsel %vm138, %v142, 0.0
    %v148 = vsel %vm138, %v144, 0.0
    %v149 = vadd.f32 %v147, %v114
    %v150 = vadd.f32 %v148, %v119
    %v151 = vld [vmem:[%s2] sm:$0xff]
    %v152 = vld [vmem:[%s2 + $0x8] sm:$0xff]
    %154 = vset.pattern.permute.xlu0 0
    %155 = vperm.xlu0 %154, %v151
    %v156 = vpop.permute.xlu0 %155
    %159 = vset.pattern.permute.xlu0 0
    %160 = vperm.xlu0 %159, %v152
    %v161 = vpop.permute.xlu0 %160
    %v163 = vadd.f32 %v149, %v156
    %v164 = vadd.f32 %v150, %v161
    %v165 = vtanh.pop %v163
    %v166 = vxor.u32 %v164, 2147483648
    %v167 = vmul.f32 %v166, 1.442695
    %v168 = vpow.pop %v167
    %v169 = vadd.f32 %v168, 1.0
    %v170 = vrcp.pop %v169
    %v171 = vmul.f32 1.0, %v170
    %v172 = vmul.f32 %v165, %v171
    %vm173 = vcmask 257024
    %174 = vst.msk [vmem:[#allocation2] sm:$0xf] %vm173, %v15
    %vm175 = vcmask 261120
    %176 = vst.msk [vmem:[#allocation2 + $0x4] sm:$0xff] %vm175, %v172
    // Predicated region
    $region14: #{tpu_custom_call.1} parent=1 // pred_check
      _
    $region15: #{tpu_custom_call.1} parent=1 // pred_check_branch
      %178 = sbr.rel (0) target = $region17
    $region16: #{tpu_custom_call.1} parent=1 // pred_region
      %s180 = ssub.s32 256, 256
      %181 = vsyncadd [#allocation3], %s180
      %s182 = sshll.u32 [#allocation2], 4
      %s183 = int_to_ptr.vmem [resolvable:$true] %s182
      %188 = dma.vmem_to_hbm [thread:$0]  %s183, 256, %s3, [#allocation3], 128, 128, 8
    $region17: #{tpu_custom_call.1} parent=1 // pred_fallthru
      _
    // Predicated region
    $region18: #{tpu_custom_call.1} parent=1 // pred_check
      _
    $region19: #{tpu_custom_call.1} parent=1 // pred_check_branch
      %190 = sbr.rel (0) target = $region21
    $region20: #{tpu_custom_call.1} parent=1 // pred_region
      %191 = dma.done [#allocation3], 256
    $region21: #{tpu_custom_call.1} parent=1 // pred_fallthru
      _
    %192 = vsyncpa [#allocation3], 1

</llo_original>
